<compile_context>
chip_gen: v5e
topology: v5e:2x2
jax: 0.10.0
libtpu: 0.0.40
codegen_flags: <defaults>
</compile_context>

<pallas_src>
import math

import jax
import jax.numpy as jnp
from jax.experimental import pallas as pl
from jax.experimental.pallas import tpu as pltpu


_GELU_C = math.sqrt(2.0 / math.pi)


def _gelu_tanh(x):
    # GELU(approximate='tanh'): 0.5*x*(1 + tanh(sqrt(2/pi)*(x + 0.044715*x^3)))
    return 0.5 * x * (1.0 + jnp.tanh(_GELU_C * (x + 0.044715 * x * x * x)))


def _round_up(a, b):
    return (a + b - 1) // b * b


def mlp_kernel(x_ref, w1_ref, b1_ref, w2_ref, b2_ref, o_ref, acc_ref):
    # x_ref : (tm, Dp)   bf16 token tile (constant across the j axis)
    # w1_ref: (Dp, th)   bf16 fc-weight H-chunk
    # b1_ref: (1, th)    f32  fc-bias H-chunk
    # w2_ref: (th, Dp)   bf16 proj-weight H-chunk
    # b2_ref: (1, Dp)    f32  proj bias (constant)
    # o_ref : (tm, Dp)   output tile (resident across the j axis)
    # acc_ref:(tm, Dp)   f32 accumulator scratch
    j = pl.program_id(1)

    @pl.when(j == 0)
    def _init():
        # Fold the proj bias into the accumulator init (hoists the broadcast
        # out of the H-chunk loop).
        acc_ref[...] = jnp.broadcast_to(
            b2_ref[...].astype(jnp.float32), acc_ref.shape)

    # First matmul on the MXU: bf16 inputs, f32 accumulation.
    h = jnp.dot(x_ref[...], w1_ref[...], preferred_element_type=jnp.float32)
    # GELU in f32 (no bf16 VPU/EUP on v5e), then cast to bf16 for the MXU.
    h = _gelu_tanh(h + b1_ref[...])
    acc_ref[...] += jnp.dot(
        h.astype(jnp.bfloat16), w2_ref[...], preferred_element_type=jnp.float32)

    @pl.when(j == pl.num_programs(1) - 1)
    def _finalize():
        o_ref[...] = acc_ref[...].astype(o_ref.dtype)


def mlp_forward(x, w1, b1, w2, b2, *, tm=256, th=512):
    """x: (..., D); w1: (D, 4D); b1: (1, 4D); w2: (4D, D); b2: (1, D)."""
    orig_shape = x.shape
    out_dtype = x.dtype
    D = orig_shape[-1]
    H = w1.shape[1]
    x2 = x.reshape(-1, D)
    N = x2.shape[0]

    # Effective tile sizes (shrink for tiny problems, keep (8,128) alignment).
    tm = min(tm, _round_up(N, 8))
    th = min(th, _round_up(H, 128))

    # Padded extents: N multiple of tm, D lane-dense (x128), H multiple of th.
    Np = _round_up(N, tm)
    Dp = _round_up(D, 128)
    Hp = _round_up(H, th)

    # Zero padding keeps the math exact: padded input features / hidden units
    # contribute zero, padded tokens & output columns are sliced off.
    xp = jnp.zeros((Np, Dp), jnp.bfloat16).at[:N, :D].set(x2.astype(jnp.bfloat16))
    w1p = jnp.zeros((Dp, Hp), jnp.bfloat16).at[:D, :H].set(w1.astype(jnp.bfloat16))
    b1p = jnp.zeros((1, Hp), jnp.float32).at[:, :H].set(b1.astype(jnp.float32))
    w2p = jnp.zeros((Hp, Dp), jnp.bfloat16).at[:H, :D].set(w2.astype(jnp.bfloat16))
    b2p = jnp.zeros((1, Dp), jnp.float32).at[:, :D].set(b2.astype(jnp.float32))

    grid = (Np // tm, Hp // th)
    out_itemsize = jnp.dtype(out_dtype).itemsize

    # VMEM budget (double-buffered inputs/outputs + f32 accumulator),
    # capped at 48 MiB so the config also fits v7x's 64 MiB VMEM.
    vmem_bytes = (
        2 * (tm * Dp * 2            # x tile (bf16)
             + Dp * th * 2          # w1 chunk (bf16)
             + th * Dp * 2          # w2 chunk (bf16)
             + 8 * th * 4           # b1 chunk (f32, sublane-padded)
             + 8 * Dp * 4           # b2 (f32, sublane-padded)
             + tm * Dp * out_itemsize)  # out tile
        + tm * Dp * 4)              # accumulator scratch
    vmem_limit = int(min(max(vmem_bytes * 3 // 2, 16 * 2**20), 48 * 2**20))

    cost = pl.CostEstimate(
        flops=4 * N * D * H,          # two matmuls, 2*N*D*H FLOPs each
        transcendentals=N * H,        # tanh in GELU
        bytes_accessed=(N * D * 4 + D * H * 2 + H * D * 2
                        + H * 4 + D * 4 + N * D * out_itemsize),
    )

    out = pl.pallas_call(
        mlp_kernel,
        out_shape=jax.ShapeDtypeStruct((Np, Dp), out_dtype),
        grid_spec=pltpu.PrefetchScalarGridSpec(
            num_scalar_prefetch=0,
            grid=grid,
            in_specs=[
                pl.BlockSpec((tm, Dp), lambda i, j: (i, 0)),   # x tile (const over j)
                pl.BlockSpec((Dp, th), lambda i, j: (0, j)),   # w_fc H-chunk
                pl.BlockSpec((1, th), lambda i, j: (0, j)),    # b_fc H-chunk
                pl.BlockSpec((th, Dp), lambda i, j: (j, 0)),   # w_proj H-chunk
                pl.BlockSpec((1, Dp), lambda i, j: (0, 0)),    # b_proj (const)
            ],
            out_specs=pl.BlockSpec((tm, Dp), lambda i, j: (i, 0)),
            scratch_shapes=[pltpu.VMEM((tm, Dp), jnp.float32)],
        ),
        compiler_params=pltpu.CompilerParams(
            dimension_semantics=("parallel", "arbitrary"),
            vmem_limit_bytes=vmem_limit,
        ),
        cost_estimate=cost,
    )(xp, w1p, b1p, w2p, b2p)

    return out[:N, :D].reshape(orig_shape)


def make_params(key, n_embd):
    """Deterministic params matching nn.Linear default init (uniform +-1/sqrt(fan_in))."""
    h = 4 * n_embd
    k1, k2, k3, k4 = jax.random.split(key, 4)
    bound1 = 1.0 / math.sqrt(n_embd)
    bound2 = 1.0 / math.sqrt(h)
    # stored transposed vs torch: (in, out)
    w1 = jax.random.uniform(k1, (n_embd, h), jnp.float32, -bound1, bound1)
    b1 = jax.random.uniform(k2, (1, h), jnp.float32, -bound1, bound1)
    w2 = jax.random.uniform(k3, (h, n_embd), jnp.float32, -bound2, bound2)
    b2 = jax.random.uniform(k4, (1, n_embd), jnp.float32, -bound2, bound2)
    return w1, b1, w2, b2


if __name__ == "__main__":
    B, T, n_embd = 2, 8, 32   # hidden = 4 * 32 = 128
    key = jax.random.PRNGKey(0)
    kx, kp = jax.random.split(key)
    x = jax.random.normal(kx, (B, T, n_embd), jnp.float32)
    w1, b1, w2, b2 = make_params(kp, n_embd)

    out = mlp_forward(x, w1, b1, w2, b2)
    out = jax.block_until_ready(out)

    # pure-JAX f32 reference check (bf16 matmul inputs -> loose tolerance)
    ref = jnp.dot(x.reshape(-1, n_embd), w1) + b1
    ref = _gelu_tanh(ref)
    ref = (jnp.dot(ref, w2) + b2).reshape(B, T, n_embd)
    assert out.shape == ref.shape
    assert jnp.allclose(out, ref, atol=2e-2, rtol=2e-2), "mismatch vs reference"

    print("KERNEL_OK")
</pallas_src>

<mosaic_0001>
module attributes {stable_mosaic.version = 11 : i64} {
  func.func @mlp_kernel(%arg0: i32, %arg1: i32, %arg2: memref<16x128xbf16, #tpu.memory_space<vmem>>, %arg3: memref<128x128xbf16, #tpu.memory_space<vmem>>, %arg4: memref<1x128xf32, #tpu.memory_space<vmem>>, %arg5: memref<128x128xbf16, #tpu.memory_space<vmem>>, %arg6: memref<1x128xf32, #tpu.memory_space<vmem>>, %arg7: memref<16x128xf32, #tpu.memory_space<vmem>>, %arg8: memref<16x128xf32, #tpu.memory_space<vmem>>) attributes {dimension_semantics = [#tpu.dimension_semantics<parallel>, #tpu.dimension_semantics<arbitrary>], iteration_bounds = array<i64: 1, 1>, scalar_prefetch = 0 : i64, scratch_operands = 1 : i64, tpu.core_type = #tpu.core_type<tc>, window_params = [{transform_indices = @transform_0, window_bounds = array<i64: 16, 128>}, {transform_indices = @transform_1, window_bounds = array<i64: 128, 128>}, {transform_indices = @transform_2, window_bounds = array<i64: 1, 128>}, {transform_indices = @transform_3, window_bounds = array<i64: 128, 128>}, {pipeline_mode = #tpu.pipeline_mode<synchronous>, transform_indices = @transform_4, window_bounds = array<i64: 1, 128>}, {transform_indices = @transform_5, window_bounds = array<i64: 16, 128>}]} {
    %c0_i32 = arith.constant 0 : i32
    %0 = arith.cmpi eq, %arg1, %c0_i32 : i32
    %1 = arith.extui %0 : i1 to i32
    %c0_i32_0 = arith.constant 0 : i32
    %2 = arith.cmpi ne, %1, %c0_i32_0 : i32
    scf.if %2 {
      %c0_19 = arith.constant 0 : index
      %c0_20 = arith.constant 0 : index
      %31 = vector.load %arg6[%c0_19, %c0_20] : memref<1x128xf32, #tpu.memory_space<vmem>>, vector<1x128xf32>
      %32 = vector.shape_cast %31 : vector<1x128xf32> to vector<1x128xf32>
      %33 = vector.broadcast %32 : vector<1x128xf32> to vector<16x128xf32>
      %c0_21 = arith.constant 0 : index
      %c0_22 = arith.constant 0 : index
      %34 = vector.load %arg8[%c0_21, %c0_22] : memref<16x128xf32, #tpu.memory_space<vmem>>, vector<16x128xf32>
      tpu.vector_store %arg8[%c0_21, %c0_22], %33 {strides = array<i32>} : memref<16x128xf32, #tpu.memory_space<vmem>>, vector<16x128xf32>,
    } else {
    }
    %c0 = arith.constant 0 : index
    %c0_1 = arith.constant 0 : index
    %3 = vector.load %arg2[%c0, %c0_1] : memref<16x128xbf16, #tpu.memory_space<vmem>>, vector<16x128xbf16>
    %c0_2 = arith.constant 0 : index
    %c0_3 = arith.constant 0 : index
    %4 = vector.load %arg3[%c0_2, %c0_3] : memref<128x128xbf16, #tpu.memory_space<vmem>>, vector<128x128xbf16>
    %cst = arith.constant dense<0.000000e+00> : vector<16x128xf32>
    %5 = tpu.matmul %3, %4, %cst {dimension_numbers = #tpu.dot_dimension_numbers<[1], [0], [0], [1], [0, 0, 1, 1], [], []>} : vector<16x128xbf16>, vector<128x128xbf16>, vector<16x128xf32> -> vector<16x128xf32>
    %c0_4 = arith.constant 0 : index
    %c0_5 = arith.constant 0 : index
    %6 = vector.load %arg4[%c0_4, %c0_5] : memref<1x128xf32, #tpu.memory_space<vmem>>, vector<1x128xf32>
    %7 = vector.broadcast %6 : vector<1x128xf32> to vector<16x128xf32>
    %8 = arith.addf %5, %7 : vector<16x128xf32>
    %cst_6 = arith.constant 5.000000e-01 : f32
    %9 = vector.broadcast %cst_6 : f32 to vector<16x128xf32>
    %10 = arith.mulf %9, %8 : vector<16x128xf32>
    %cst_7 = arith.constant 4.471500e-02 : f32
    %11 = vector.broadcast %cst_7 : f32 to vector<16x128xf32>
    %12 = arith.mulf %11, %8 : vector<16x128xf32>
    %13 = arith.mulf %12, %8 : vector<16x128xf32>
    %14 = arith.mulf %13, %8 : vector<16x128xf32>
    %15 = arith.addf %8, %14 : vector<16x128xf32>
    %cst_8 = arith.constant 0.797884583 : f32
    %16 = vector.broadcast %cst_8 : f32 to vector<16x128xf32>
    %17 = arith.mulf %16, %15 : vector<16x128xf32>
    %18 = math.tanh %17 : vector<16x128xf32>
    %cst_9 = arith.constant 1.000000e+00 : f32
    %19 = vector.broadcast %cst_9 : f32 to vector<16x128xf32>
    %20 = arith.addf %19, %18 : vector<16x128xf32>
    %21 = arith.mulf %10, %20 : vector<16x128xf32>
    %c0_10 = arith.constant 0 : index
    %c0_11 = arith.constant 0 : index
    %22 = vector.load %arg8[%c0_10, %c0_11] : memref<16x128xf32, #tpu.memory_space<vmem>>, vector<16x128xf32>
    %23 = arith.truncf %21 : vector<16x128xf32> to vector<16x128xbf16>
    %c0_12 = arith.constant 0 : index
    %c0_13 = arith.constant 0 : index
    %24 = vector.load %arg5[%c0_12, %c0_13] : memref<128x128xbf16, #tpu.memory_space<vmem>>, vector<128x128xbf16>
    %cst_14 = arith.constant dense<0.000000e+00> : vector<16x128xf32>
    %25 = tpu.matmul %23, %24, %cst_14 {dimension_numbers = #tpu.dot_dimension_numbers<[1], [0], [0], [1], [0, 0, 1, 1], [], []>} : vector<16x128xbf16>, vector<128x128xbf16>, vector<16x128xf32> -> vector<16x128xf32>
    %26 = arith.addf %22, %25 : vector<16x128xf32>
    %c0_15 = arith.constant 0 : index
    %c0_16 = arith.constant 0 : index
    %27 = vector.load %arg8[%c0_15, %c0_16] : memref<16x128xf32, #tpu.memory_space<vmem>>, vector<16x128xf32>
    tpu.vector_store %arg8[%c0_15, %c0_16], %26 {strides = array<i32>} : memref<16x128xf32, #tpu.memory_space<vmem>>, vector<16x128xf32>,
    %c0_i32_17 = arith.constant 0 : i32
    %28 = arith.cmpi eq, %arg1, %c0_i32_17 : i32
    %29 = arith.extui %28 : i1 to i32
    %c0_i32_18 = arith.constant 0 : i32
    %30 = arith.cmpi ne, %29, %c0_i32_18 : i32
    scf.if %30 {
      %c0_19 = arith.constant 0 : index
      %c0_20 = arith.constant 0 : index
      %31 = vector.load %arg8[%c0_19, %c0_20] : memref<16x128xf32, #tpu.memory_space<vmem>>, vector<16x128xf32>
      %c0_21 = arith.constant 0 : index
      %c0_22 = arith.constant 0 : index
      %32 = vector.load %arg7[%c0_21, %c0_22] : memref<16x128xf32, #tpu.memory_space<vmem>>, vector<16x128xf32>
      tpu.vector_store %arg7[%c0_21, %c0_22], %31 {strides = array<i32>} : memref<16x128xf32, #tpu.memory_space<vmem>>, vector<16x128xf32>,
    } else {
    }
    return
  }
  func.func @transform_0(%arg0: i32, %arg1: i32) -> (i32, i32) {
    %c0_i32 = arith.constant 0 : i32
    %c0_i32_0 = arith.constant 0 : i32
    return %arg0, %c0_i32 : i32, i32
  }
  func.func @transform_1(%arg0: i32, %arg1: i32) -> (i32, i32) {
    %c0_i32 = arith.constant 0 : i32
    %c0_i32_0 = arith.constant 0 : i32
    return %c0_i32, %arg1 : i32, i32
  }
  func.func @transform_2(%arg0: i32, %arg1: i32) -> (i32, i32) {
    %c0_i32 = arith.constant 0 : i32
    %c0_i32_0 = arith.constant 0 : i32
    return %c0_i32, %arg1 : i32, i32
  }
  func.func @transform_3(%arg0: i32, %arg1: i32) -> (i32, i32) {
    %c0_i32 = arith.constant 0 : i32
    %c0_i32_0 = arith.constant 0 : i32
    return %arg1, %c0_i32 : i32, i32
  }
  func.func @transform_4(%arg0: i32, %arg1: i32) -> (i32, i32) {
    %c0_i32 = arith.constant 0 : i32
    %c0_i32_0 = arith.constant 0 : i32
    %c0_i32_1 = arith.constant 0 : i32
    return %c0_i32, %c0_i32_0 : i32, i32
  }
  func.func @transform_5(%arg0: i32, %arg1: i32) -> (i32, i32) {
    %c0_i32 = arith.constant 0 : i32
    %c0_i32_0 = arith.constant 0 : i32
    return %arg0, %c0_i32 : i32, i32
  }
}

</mosaic_0001>

<llo_original>
// kernel: tpu_custom_call.1
$region0: #{tpu_custom_call.1}
  #allocation0 [shape = 'u32[]', space=smem, size = 0x4, offset = 0x4, fixed_abs, tag = 'smem constant byte address 0x4 - core index']
  #allocation1 [shape = 'u32[72,128]{1,0:T(1,128)}', space=vmem, size = 0x9000, scoped, tag = 'internal scratch']
  #allocation2 [shape = 'f32[16,128]{1,0:T(8,128)}', space=vmem, size = 0x2000, scoped, tag = 'scratch operand']
  %s0 = inlined_call_operand.hbm [shape: bf16[16,128], index: 0, kind: input, shape index: {}]
  %s1 = inlined_call_operand.hbm [shape: bf16[128,128], index: 1, kind: input, shape index: {}]
  %s2 = inlined_call_operand.vmem [shape: f32[1,128], index: 2, kind: input, shape index: {}]
  %s3 = inlined_call_operand.hbm [shape: bf16[128,128], index: 3, kind: input, shape index: {}]
  %s4 = inlined_call_operand.vmem [shape: f32[1,128], index: 4, kind: input, shape index: {}]
  %s5 = inlined_call_operand.hbm [shape: f32[16,128], index: 5, kind: output, shape index: {}]
  %s6 = sld [smem:[#allocation0]]
  $region50: #{tpu_custom_call.1} parent=0
    _
  %s8 = ssub.s32 1, %s6
  %s9 = scalar_select 0, %s8, %s6
  $region1: #{tpu_custom_call.1} parent=0
    #allocation3 [shape = 'u8[4096]{0}', space=vmem, size = 0x1000, scoped, tag = 'input window, operand 0, single buffered']
    #allocation4 [shape = 's32[1]{0}', space=sflag, size = 0x4, scoped, tag = 'scoped memory for tpu_custom_call.1']
    #allocation5 [shape = 's32[1]{0}', space=sflag, size = 0x4, scoped, tag = 'scoped memory for tpu_custom_call.1']
    #allocation6 [shape = 'u8[32768]{0}', space=vmem, size = 0x8000, scoped, tag = 'input window, operand 1, single buffered']
    #allocation7 [shape = 's32[1]{0}', space=sflag, size = 0x4, scoped, tag = 'scoped memory for tpu_custom_call.1']
    #allocation8 [shape = 'u8[32768]{0}', space=vmem, size = 0x8000, scoped, tag = 'input window, operand 3, single buffered']
    #allocation9 [shape = 'u8[8192]{0}', space=vmem, size = 0x2000, scoped, tag = 'output window, operand 0, single buffered']
    %10 = vsyncpa [#allocation4], 0
    %11 = vsyncpa [#allocation7], 0
    %12 = vsyncpa [#allocation5], 0
    // Predicated region
    $region2: #{tpu_custom_call.1} parent=1 // pred_check
      _
    $region3: #{tpu_custom_call.1} parent=1 // pred_check_branch
      %14 = sbr.rel (0) target = $region5
    $region4: #{tpu_custom_call.1} parent=1 // pred_region
      %16 = vsyncadd [#allocation4], 0
      %s17 = sshll.u32 %s0, 4
      %s18 = int_to_ptr.hbm [resolvable:$true] %s17
      %s19 = sshll.u32 [#allocation3], 4
      %s20 = int_to_ptr.vmem [resolvable:$true] %s19
      %25 = dma.hbm_to_vmem [thread:$0]  %s18, 128, %s20, [#allocation4], 64, 64, 4
    $region5: #{tpu_custom_call.1} parent=1 // pred_fallthru
      _
    // Predicated region
    $region6: #{tpu_custom_call.1} parent=1 // pred_check
      _
    $region7: #{tpu_custom_call.1} parent=1 // pred_check_branch
      %27 = sbr.rel (0) target = $region9
    $region8: #{tpu_custom_call.1} parent=1 // pred_region
      %29 = vsyncadd [#allocation7], 0
      %s30 = sshll.u32 %s1, 4
      %s31 = int_to_ptr.hbm [resolvable:$true] %s30
      %s32 = sshll.u32 [#allocation6], 4
      %s33 = int_to_ptr.vmem [resolvable:$true] %s32
      %38 = dma.hbm_to_vmem [thread:$0]  %s31, 1024, %s33, [#allocation7], 64, 64, 4
    $region9: #{tpu_custom_call.1} parent=1 // pred_fallthru
      _
    // Predicated region
    $region10: #{tpu_custom_call.1} parent=1 // pred_check
      _
    $region11: #{tpu_custom_call.1} parent=1 // pred_check_branch
      %40 = sbr.rel (0) target = $region13
    $region12: #{tpu_custom_call.1} parent=1 // pred_region
      _
    $region13: #{tpu_custom_call.1} parent=1 // pred_fallthru
      _
    // Predicated region
    $region14: #{tpu_custom_call.1} parent=1 // pred_check
      _
    $region15: #{tpu_custom_call.1} parent=1 // pred_check_branch
      %42 = sbr.rel (0) target = $region17
    $region16: #{tpu_custom_call.1} parent=1 // pred_region
      %44 = vsyncadd [#allocation7], 0
      %s45 = sshll.u32 %s3, 4
      %s46 = int_to_ptr.hbm [resolvable:$true] %s45
      %s47 = sshll.u32 [#allocation8], 4
      %s48 = int_to_ptr.vmem [resolvable:$true] %s47
      %53 = dma.hbm_to_vmem [thread:$0]  %s46, 1024, %s48, [#allocation7], 64, 64, 4
    $region17: #{tpu_custom_call.1} parent=1 // pred_fallthru
      _
    // Predicated region
    $region18: #{tpu_custom_call.1} parent=1 // pred_check
      _
    $region19: #{tpu_custom_call.1} parent=1 // pred_check_branch
      %55 = sbr.rel (0) target = $region21
    $region20: #{tpu_custom_call.1} parent=1 // pred_region
      _
    $region21: #{tpu_custom_call.1} parent=1 // pred_fallthru
      _
    // Predicated region
    $region22: #{tpu_custom_call.1} parent=1 // pred_check
      _
    $region23: #{tpu_custom_call.1} parent=1 // pred_check_branch
      %57 = sbr.rel (0) target = $region25
    $region24: #{tpu_custom_call.1} parent=1 // pred_region
      %59 = dma.done [#allocation4], 128
    $region25: #{tpu_custom_call.1} parent=1 // pred_fallthru
      _
    // Predicated region
    $region26: #{tpu_custom_call.1} parent=1 // pred_check
      _
    $region27: #{tpu_custom_call.1} parent=1 // pred_check_branch
      %61 = sbr.rel (0) target = $region29
    $region28: #{tpu_custom_call.1} parent=1 // pred_region
      %63 = dma.done [#allocation7], 1024
    $region29: #{tpu_custom_call.1} parent=1 // pred_fallthru
      _
    // Predicated region
    $region30: #{tpu_custom_call.1} parent=1 // pred_check
      _
    $region31: #{tpu_custom_call.1} parent=1 // pred_check_branch
      %65 = sbr.rel (0) target = $region33
    $region32: #{tpu_custom_call.1} parent=1 // pred_region
      %67 = dma.done [#allocation7], 1024
    $region33: #{tpu_custom_call.1} parent=1 // pred_fallthru
      _
    %p68 = scmp.eq.s32.totalorder 0, 0
    // Predicated region
    $region34: #{tpu_custom_call.1} parent=1 // pred_check
      %p69 = pneg %p68
    $region35: #{tpu_custom_call.1} parent=1 // pred_check_branch
      %71 = sbr.rel (%p69) target = $region37
    $region36: #{tpu_custom_call.1} parent=1 // pred_region
      %v72 = vld [vmem:[%s4] sm:$0x1]
      %v74 = vperm.slane %v72, 0
      %76 = vst [vmem:[#allocation2] sm:$0xff] %v74
      %77 = vst [vmem:[#allocation2 + $0x8] sm:$0xff] %v74
    $region37: #{tpu_custom_call.1} parent=1 // pred_fallthru
      _
    %v78 = vld [vmem:[#allocation3] sm:$0xf]
    %v79 = vld [vmem:[#allocation3 + $0x4] sm:$0xf]
    %v80 = vld [vmem:[#allocation6] sm:$0xf]
    %v81 = vld [vmem:[#allocation6 + $0x4] sm:$0xf]
    %v82 = vld [vmem:[#allocation6 + $0x8] sm:$0xf]
    %v83 = vld [vmem:[#allocation6 + $0xc] sm:$0xf]
    %v84 = vld [vmem:[#allocation6 + $0x10] sm:$0xf]
    %v85 = vld [vmem:[#allocation6 + $0x14] sm:$0xf]
    %v86 = vld [vmem:[#allocation6 + $0x18] sm:$0xf]
    %v87 = vld [vmem:[#allocation6 + $0x1c] sm:$0xf]
    %v88 = vld [vmem:[#allocation6 + $0x20] sm:$0xf]
    %v89 = vld [vmem:[#allocation6 + $0x24] sm:$0xf]
    %v90 = vld [vmem:[#allocation6 + $0x28] sm:$0xf]
    %v91 = vld [vmem:[#allocation6 + $0x2c] sm:$0xf]
    %v92 = vld [vmem:[#allocation6 + $0x30] sm:$0xf]
    %v93 = vld [vmem:[#allocation6 + $0x34] sm:$0xf]
    %v94 = vld [vmem:[#allocation6 + $0x38] sm:$0xf]
    %v95 = vld [vmem:[#allocation6 + $0x3c] sm:$0xf]
    %v96 = vld [vmem:[%s2] sm:$0x1]
    %v98 = vperm.slane %v96, 0
    %v102 = vunpack.c.l.b16 %v78
    %v103 = vunpack.c.l.b16 %v79
    %v104 = vpack.c.b16 %v103, %v102
    %v122 = vunpack.c.l.b16 %v80
    %v123 = vunpack.c.l.b16 %v81
    %v124 = vunpack.c.l.b16 %v82
    %v125 = vunpack.c.l.b16 %v83
    %v126 = vunpack.c.l.b16 %v84
    %v127 = vunpack.c.l.b16 %v85
    %v128 = vunpack.c.l.b16 %v86
    %v129 = vunpack.c.l.b16 %v87
    %v130 = vunpack.c.l.b16 %v88
    %v131 = vunpack.c.l.b16 %v89
    %v132 = vunpack.c.l.b16 %v90
    %v133 = vunpack.c.l.b16 %v91
    %v134 = vunpack.c.l.b16 %v92
    %v135 = vunpack.c.l.b16 %v93
    %v136 = vunpack.c.l.b16 %v94
    %v137 = vunpack.c.l.b16 %v95
    %v138 = vpack.c.b16 %v123, %v122
    %v139 = vpack.c.b16 %v125, %v124
    %v140 = vpack.c.b16 %v127, %v126
    %v141 = vpack.c.b16 %v129, %v128
    %v142 = vpack.c.b16 %v131, %v130
    %v143 = vpack.c.b16 %v133, %v132
    %v144 = vpack.c.b16 %v135, %v134
    %v145 = vpack.c.b16 %v137, %v136
    %154 = vmatpush.bf16.msra.mxu0 %v145
    %155 = vmatpush.bf16.msra.mxu0 %v144
    %156 = vmatpush.bf16.msra.mxu0 %v143
    %157 = vmatpush.bf16.msra.mxu0 %v142
    %158 = vmatpush.bf16.msra.mxu0 %v141
    %159 = vmatpush.bf16.msra.mxu0 %v140
    %160 = vmatpush.bf16.msra.mxu0 %v139
    %161 = vmatpush.bf16.msra.mxu0 %v138
    %162 = vmatmul.bf16.gmra.mxu0 %v104
    %v163 = vpop.f32.mrf.mxu0
    %v164 = vadd.f32 %v98, %v163
    %v165 = vpop.f32.mrf.mxu0
    %v166 = vadd.f32 %v98, %v165
    %167 = vdwg.mxu0
    %v168 = vmul.f32 %v164, 0.5
    %v169 = vmul.f32 %v166, 0.5
    %v170 = vmul.f32 %v164, 0.044715
    %v171 = vmul.f32 %v166, 0.044715
    %v172 = vmul.f32 %v170, %v164
    %v173 = vmul.f32 %v171, %v166
    %v174 = vmul.f32 %v172, %v164
    %v175 = vmul.f32 %v173, %v166
    %v176 = vadd.f32 %v164, %v174
    %v177 = vadd.f32 %v166, %v175
    %v178 = vmul.f32 %v176, 0.7978846
    %v179 = vmul.f32 %v177, 0.7978846
    %v180 = vtanh.pop %v178
    %v181 = vtanh.pop %v179
    %v182 = vadd.f32 %v180, 1.0
    %v183 = vadd.f32 %v181, 1.0
    %v184 = vmul.f32 %v168, %v182
    %v185 = vmul.f32 %v169, %v183
    %v186 = vld [vmem:[#allocation2] sm:$0xff]
    %v187 = vld [vmem:[#allocation2 + $0x8] sm:$0xff]
    %v188 = vpack.c.bf16 %v185, %v184
    %v189 = vld [vmem:[#allocation8] sm:$0xf]
    %v190 = vld [vmem:[#allocation8 + $0x4] sm:$0xf]
    %v191 = vld [vmem:[#allocation8 + $0x8] sm:$0xf]
    %v192 = vld [vmem:[#allocation8 + $0xc] sm:$0xf]
    %v193 = vld [vmem:[#allocation8 + $0x10] sm:$0xf]
    %v194 = vld [vmem:[#allocation8 + $0x14] sm:$0xf]
    %v195 = vld [vmem:[#allocation8 + $0x18] sm:$0xf]
    %v196 = vld [vmem:[#allocation8 + $0x1c] sm:$0xf]
    %v197 = vld [vmem:[#allocation8 + $0x20] sm:$0xf]
    %v198 = vld [vmem:[#allocation8 + $0x24] sm:$0xf]
    %v199 = vld [vmem:[#allocation8 + $0x28] sm:$0xf]
    %v200 = vld [vmem:[#allocation8 + $0x2c] sm:$0xf]
    %v201 = vld [vmem:[#allocation8 + $0x30] sm:$0xf]
    %v202 = vld [vmem:[#allocation8 + $0x34] sm:$0xf]
    %v203 = vld [vmem:[#allocation8 + $0x38] sm:$0xf]
    %v204 = vld [vmem:[#allocation8 + $0x3c] sm:$0xf]
    %v221 = vunpack.c.l.b16 %v189
    %v222 = vunpack.c.l.b16 %v190
    %v223 = vunpack.c.l.b16 %v191
    %v224 = vunpack.c.l.b16 %v192
    %v225 = vunpack.c.l.b16 %v193
    %v226 = vunpack.c.l.b16 %v194
    %v227 = vunpack.c.l.b16 %v195
    %v228 = vunpack.c.l.b16 %v196
    %v229 = vunpack.c.l.b16 %v197
    %v230 = vunpack.c.l.b16 %v198
    %v231 = vunpack.c.l.b16 %v199
    %v232 = vunpack.c.l.b16 %v200
    %v233 = vunpack.c.l.b16 %v201
    %v234 = vunpack.c.l.b16 %v202
    %v235 = vunpack.c.l.b16 %v203
    %v236 = vunpack.c.l.b16 %v204
    %v237 = vpack.c.b16 %v222, %v221
    %v238 = vpack.c.b16 %v224, %v223
    %v239 = vpack.c.b16 %v226, %v225
    %v240 = vpack.c.b16 %v228, %v227
    %v241 = vpack.c.b16 %v230, %v229
    %v242 = vpack.c.b16 %v232, %v231
    %v243 = vpack.c.b16 %v234, %v233
    %v244 = vpack.c.b16 %v236, %v235
    %253 = vmatpush.bf16.msra.mxu0 %v244
    %254 = vmatpush.bf16.msra.mxu0 %v243
    %255 = vmatpush.bf16.msra.mxu0 %v242
    %256 = vmatpush.bf16.msra.mxu0 %v241
    %257 = vmatpush.bf16.msra.mxu0 %v240
    %258 = vmatpush.bf16.msra.mxu0 %v239
    %259 = vmatpush.bf16.msra.mxu0 %v238
    %260 = vmatpush.bf16.msra.mxu0 %v237
    %261 = vmatmul.bf16.gmra.mxu0 %v188
    %v262 = vpop.f32.mrf.mxu0
    %v263 = vadd.f32 0.0, %v262
    %v264 = vpop.f32.mrf.mxu0
    %v265 = vadd.f32 0.0, %v264
    %266 = vdwg.mxu0
    %v267 = vadd.f32 %v186, %v263
    %v268 = vadd.f32 %v187, %v265
    %269 = vst [vmem:[#allocation2] sm:$0xff] %v267
    %270 = vst [vmem:[#allocation2 + $0x8] sm:$0xff] %v268
    // Predicated region
    $region38: #{tpu_custom_call.1} parent=1 // pred_check
      %p271 = pneg %p68
    $region39: #{tpu_custom_call.1} parent=1 // pred_check_branch
      %273 = sbr.rel (%p271) target = $region41
    $region40: #{tpu_custom_call.1} parent=1 // pred_region
      %v274 = vld [vmem:[#allocation2] sm:$0xff]
      %v275 = vld [vmem:[#allocation2 + $0x8] sm:$0xff]
      %276 = vst [vmem:[#allocation9] sm:$0xff] %v274
      %277 = vst [vmem:[#allocation9 + $0x8] sm:$0xff] %v275
    $region41: #{tpu_custom_call.1} parent=1 // pred_fallthru
      _
    // Predicated region
    $region42: #{tpu_custom_call.1} parent=1 // pred_check
      _
    $region43: #{tpu_custom_call.1} parent=1 // pred_check_branch
      %279 = sbr.rel (0) target = $region45
    $region44: #{tpu_custom_call.1} parent=1 // pred_region
      %281 = vsyncadd [#allocation5], 0
      %s282 = sshll.u32 [#allocation9], 4
      %s283 = int_to_ptr.vmem [resolvable:$true] %s282
      %s284 = sshll.u32 %s5, 4
      %s285 = int_to_ptr.hbm [resolvable:$true] %s284
      %290 = dma.vmem_to_hbm [thread:$0]  %s283, 256, %s285, [#allocation5], 128, 128, 8
    $region45: #{tpu_custom_call.1} parent=1 // pred_fallthru
      _
    // Predicated region
    $region46: #{tpu_custom_call.1} parent=1 // pred_check
      _
    $region47: #{tpu_custom_call.1} parent=1 // pred_check_branch
      %292 = sbr.rel (0) target = $region49
    $region48: #{tpu_custom_call.1} parent=1 // pred_region
      %294 = dma.done [#allocation5], 256
    $region49: #{tpu_custom_call.1} parent=1 // pred_fallthru
      _
    %295 = vsyncpa [#allocation4], 1
    %296 = vsyncpa [#allocation7], 1
    %297 = vsyncpa [#allocation5], 1

</llo_original>
